<compile_context>
chip_gen: v6e
topology: v6e:2x2x1
jax: 0.10.0
libtpu: 0.0.40
codegen_flags: <defaults>
</compile_context>

<pallas_src>
import functools
from typing import NamedTuple

import jax
import jax.numpy as jnp
from jax import lax
from jax.experimental import pallas as pl
from jax.experimental.pallas import tpu as pltpu

LANE = 128


def _round_up(x, m):
    return (x + m - 1) // m * m


# ---------------------------------------------------------------------------
# Kernels
# ---------------------------------------------------------------------------
def _mlp_kernel(x_ref, w1_ref, b1_ref, w2_ref, b2_ref, o_ref):
    """Whole hidden dim in one shot: x@W1 -> +b1 -> ReLU -> @W2 -> +b2."""
    h = jnp.dot(x_ref[...], w1_ref[...], preferred_element_type=jnp.float32)
    h = jnp.maximum(h + b1_ref[...], 0.0)          # bias + clamp(min=0) == ReLU
    y = jnp.dot(h.astype(w2_ref.dtype), w2_ref[...],
                preferred_element_type=jnp.float32)
    o_ref[...] = (y + b2_ref[...]).astype(o_ref.dtype)


def _mlp_kernel_hchunk(x_ref, w1_ref, b1_ref, w2_ref, b2_ref, o_ref, acc_ref,
                       *, h_chunk):
    """H-chunked variant: bounds the live (TN, H) f32 intermediate; per-chunk
    bias/ReLU/cast (VPU) overlaps the next chunk's matmul (MXU)."""
    n_chunks = w1_ref.shape[1] // h_chunk
    acc_ref[...] = jnp.zeros_like(acc_ref)

    def body(c, carry):
        off = pl.multiple_of(c * h_chunk, h_chunk)
        h = jnp.dot(x_ref[...], w1_ref[:, pl.ds(off, h_chunk)],
                    preferred_element_type=jnp.float32)
        h = jnp.maximum(h + b1_ref[:, pl.ds(off, h_chunk)], 0.0)
        acc_ref[...] += jnp.dot(h.astype(w2_ref.dtype),
                                w2_ref[pl.ds(off, h_chunk), :],
                                preferred_element_type=jnp.float32)
        return carry

    lax.fori_loop(0, n_chunks, body, 0)
    o_ref[...] = (acc_ref[...] + b2_ref[...]).astype(o_ref.dtype)


# ---------------------------------------------------------------------------
# Parameter preparation (done once at init, NOT per forward call)
# ---------------------------------------------------------------------------
class TwoLayerNetParams(NamedTuple):
    w1: jax.Array   # (D_in_p, H_p)   compute dtype, zero-padded
    b1: jax.Array   # (1, H_p)        f32
    w2: jax.Array   # (H_p, D_out_p)  compute dtype
    b2: jax.Array   # (1, D_out_p)    f32
    d_in: int
    h: int
    d_out: int


def prepare_two_layer_net_params(w1, b1, w2, b2, *, compute_dtype=jnp.float32):
    """Pad+cast the weights once.  w1: (D_in, H), b1: (H,), w2: (H, D_out),
    b2: (D_out,) — i.e. torch Linear weights already transposed so the kernel
    does plain x @ W + b.  Padding is skipped when dims are 128-aligned.
    bf16 compute_dtype is recommended on v6e/v7x (f32 accumulation is kept)."""
    D_in, H = w1.shape
    D_out = w2.shape[1]
    D_in_p, H_p, D_out_p = (_round_up(d, LANE) for d in (D_in, H, D_out))

    def pad2(a, rows, cols, dtype):
        a = a.astype(dtype)
        pr, pc = rows - a.shape[0], cols - a.shape[1]
        if pr or pc:
            a = jnp.pad(a, ((0, pr), (0, pc)))
        return a

    w1p = pad2(w1, D_in_p, H_p, compute_dtype)
    w2p = pad2(w2, H_p, D_out_p, compute_dtype)
    b1p = pad2(b1.reshape(1, H), 1, H_p, jnp.float32)
    b2p = pad2(b2.reshape(1, D_out), 1, D_out_p, jnp.float32)
    return TwoLayerNetParams(w1p, b1p, w2p, b2p, D_in, H, D_out)


# ---------------------------------------------------------------------------
# VMEM budgeting & batch-tile selection
# ---------------------------------------------------------------------------
def _vmem_capacity_bytes():
    try:
        cap = getattr(pltpu.get_tpu_info(), "vmem_capacity_bytes", None)
        if cap:
            return int(cap)
    except Exception:
        pass
    return 64 << 20          # conservative fallback: v7x physical VMEM


def _working_set_bytes(tn, resident_bytes, d_in_p, h_eff, d_out_p,
                       cbytes, obytes, x_bufs):
    # streamed x / out tiles (double-buffered) + per-tile f32 intermediates.
    stream = x_bufs * tn * d_in_p * cbytes + 2 * tn * d_out_p * obytes
    live = tn * h_eff * (4 + cbytes) + 2 * tn * d_out_p * 4
    return resident_bytes + stream + live


def _choose_tn(n, sublane, tn_cap):
    cands = {t for t in (1024, 768, 512, 384, 256, 128, 64, 32, 16, 8)
             if t % sublane == 0 and t <= tn_cap}
    cands.add(min(_round_up(max(1, (n + 1) // 2), sublane), tn_cap))  # ~N/2
    cands.add(min(_round_up(n, sublane), tn_cap))

    def key(t):
        n_p = _round_up(n, t)
        steps = n_p // t
        # Prefer >=2 grid steps (keeps both v7x TCs busy), then minimal batch
        # padding waste, then the largest tile (amortizes ~0.35us/grid step).
        return (0 if steps >= 2 else 1, n_p - n, -t)

    return min(cands, key=key)


# ---------------------------------------------------------------------------
# Forward pass
# ---------------------------------------------------------------------------
def two_layer_net_apply(params, x, *, h_chunk=None, x_buffer_count=None):
    """y = relu(x @ w1 + b1) @ w2 + b2 with pre-padded params."""
    N, D_in = x.shape
    assert D_in == params.d_in, "x feature dim mismatch"
    D_in_p, H_p = params.w1.shape
    D_out_p = params.w2.shape[1]
    compute_dtype = params.w1.dtype
    cbytes = jnp.dtype(compute_dtype).itemsize
    obytes = jnp.dtype(x.dtype).itemsize
    sublane = 16 if cbytes == 2 else 8

    # ---- generation-aware VMEM budget (v7x: 64 MiB, v5e/v6e: 128 MiB) -----
    capacity = _vmem_capacity_bytes()
    budget = int(capacity * 0.85)        # headroom for compiler scratch/sems

    # Resident operands are single-buffered (pl.Buffered(1)) -> 1x weights.
    resident = ((D_in_p * H_p + H_p * D_out_p) * cbytes
                + (H_p + D_out_p) * 4)
    x_bufs = x_buffer_count if x_buffer_count else 2

    # H-chunking: bound the live (TN, H) f32 intermediate.
    if h_chunk is None:
        h_chunk = 512 if H_p > 2048 else H_p
    h_chunk = max(min(h_chunk, H_p), LANE)
    while H_p % h_chunk:                 # keep a lane-aligned divisor of H_p
        h_chunk -= LANE
    use_chunked = h_chunk < H_p

    # Largest batch tile whose working set fits the budget (<= 1024 rows).
    tn_cap = sublane
    for cand in (1024, 768, 512, 384, 256, 128, 64, 32, 16, 8):
        if cand % sublane:
            continue
        if _working_set_bytes(cand, resident, D_in_p, h_chunk, D_out_p,
                              cbytes, obytes, x_bufs) <= budget:
            tn_cap = max(cand, sublane)
            break
    # TODO(synk): streamed-weights fallback (blocked w1/w2 over an "arbitrary"
    # reduction grid axis) for layers whose weights alone exceed the VMEM
    # budget; not needed at these sizes.

    TN = _choose_tn(N, sublane, tn_cap)
    N_p = _round_up(N, TN)

    # ---- pad/cast the activation only when needed ----
    xp = x.astype(compute_dtype)
    if N_p != N or D_in_p != D_in:
        xp = jnp.pad(xp, ((0, N_p - N), (0, D_in_p - D_in)))

    # ---- always set an explicit VMEM limit (v5e scoped default: 16 MiB) ---
    needed = _working_set_bytes(TN, resident, D_in_p, h_chunk, D_out_p,
                                cbytes, obytes, x_bufs)
    vmem_limit = int(min(budget, max(needed * 1.5, 32 << 20)))

    flops = 2 * N_p * (D_in_p * H_p + H_p * D_out_p)
    bytes_accessed = (xp.size * cbytes
                      + params.w1.size * cbytes + params.w2.size * cbytes
                      + params.b1.size * 4 + params.b2.size * 4
                      + N_p * D_out_p * obytes)
    cost = pl.CostEstimate(flops=flops, transcendentals=0,
                           bytes_accessed=bytes_accessed)

    out_shape = jax.ShapeDtypeStruct((N_p, D_out_p), x.dtype)

    def call(single_buffer_resident):
        res_kwargs = {}
        if single_buffer_resident:
            res_kwargs["pipeline_mode"] = pl.Buffered(1)
        x_kwargs = {}
        if x_buffer_count and x_buffer_count != 2:
            # e.g. Buffered(3) on v5e when the x-tile DMA is exposed.
            x_kwargs["pipeline_mode"] = pl.Buffered(x_buffer_count)

        in_specs = [
            pl.BlockSpec((TN, D_in_p), lambda i: (i, 0), **x_kwargs),      # streamed x
            pl.BlockSpec((D_in_p, H_p), lambda i: (0, 0), **res_kwargs),   # resident w1
            pl.BlockSpec((1, H_p), lambda i: (0, 0), **res_kwargs),        # resident b1
            pl.BlockSpec((H_p, D_out_p), lambda i: (0, 0), **res_kwargs),  # resident w2
            pl.BlockSpec((1, D_out_p), lambda i: (0, 0), **res_kwargs),    # resident b2
        ]
        if use_chunked:
            kernel = functools.partial(_mlp_kernel_hchunk, h_chunk=h_chunk)
            scratch = [pltpu.VMEM((TN, D_out_p), jnp.float32)]
        else:
            kernel = _mlp_kernel
            scratch = []

        return pl.pallas_call(
            kernel,
            out_shape=out_shape,
            grid_spec=pltpu.PrefetchScalarGridSpec(
                num_scalar_prefetch=0,
                grid=(N_p // TN,),
                in_specs=in_specs,
                out_specs=pl.BlockSpec((TN, D_out_p), lambda i: (i, 0)),
                scratch_shapes=scratch,
            ),
            compiler_params=pltpu.CompilerParams(
                dimension_semantics=("parallel",),
                vmem_limit_bytes=vmem_limit,
            ),
            cost_estimate=cost,
        )(xp, params.w1, params.b1, params.w2, params.b2)

    try:
        out = call(single_buffer_resident=True)
    except Exception:
        # Defensive fallback if this Pallas/Mosaic build rejects Buffered(1)
        # on pallas_call BlockSpecs: default (double-buffered) residency.
        # Numerics are identical; only VMEM footprint differs.
        out = call(single_buffer_resident=False)

    if N_p != N or D_out_p != params.d_out:
        out = out[:N, :params.d_out]
    return out


def two_layer_net(x, w1, b1, w2, b2, *, compute_dtype=jnp.float32, **kwargs):
    """Convenience wrapper (pads weights per call).  Prefer
    prepare_two_layer_net_params() + two_layer_net_apply() in real use."""
    params = prepare_two_layer_net_params(w1, b1, w2, b2,
                                          compute_dtype=compute_dtype)
    return two_layer_net_apply(params, x, **kwargs)


def reference(x, w1, b1, w2, b2):
    h = jnp.maximum(x @ w1 + b1, 0.0)
    return h @ w2 + b2


if __name__ == "__main__":
    # Small shapes consistent with the module: batch=8, D_in=32, H=64, D_out=16.
    N, D_in, H, D_out = 8, 32, 64, 16
    key = jax.random.PRNGKey(0)
    kx, kw1, kb1, kw2, kb2 = jax.random.split(key, 5)

    x = jax.random.normal(kx, (N, D_in), dtype=jnp.float32)
    bound1 = 1.0 / (D_in ** 0.5)
    bound2 = 1.0 / (H ** 0.5)
    w1 = jax.random.uniform(kw1, (D_in, H), jnp.float32, -bound1, bound1)
    b1 = jax.random.uniform(kb1, (H,), jnp.float32, -bound1, bound1)
    w2 = jax.random.uniform(kw2, (H, D_out), jnp.float32, -bound2, bound2)
    b2 = jax.random.uniform(kb2, (D_out,), jnp.float32, -bound2, bound2)

    y_ref = reference(x, w1, b1, w2, b2)

    # f32 path (pre-padded params, single-buffered resident weights).
    params_f32 = prepare_two_layer_net_params(w1, b1, w2, b2,
                                              compute_dtype=jnp.float32)
    y_f32 = two_layer_net_apply(params_f32, x)
    jax.block_until_ready(y_f32)
    assert y_f32.shape == (N, D_out)
    assert jnp.allclose(y_f32, y_ref, atol=1e-5, rtol=1e-5)

    # bf16 compute path (f32 accumulation): looser tolerance.
    params_bf16 = prepare_two_layer_net_params(w1, b1, w2, b2,
                                               compute_dtype=jnp.bfloat16)
    y_bf16 = two_layer_net_apply(params_bf16, x)
    jax.block_until_ready(y_bf16)
    assert y_bf16.shape == (N, D_out)
    assert jnp.allclose(y_bf16, y_ref, atol=5e-2, rtol=5e-2)

    # H-chunked accumulation path (forced 128-wide chunks on a 256-wide H).
    H2 = 256
    bound2b = 1.0 / (H2 ** 0.5)
    w1b = jax.random.uniform(kw1, (D_in, H2), jnp.float32, -bound1, bound1)
    b1b = jax.random.uniform(kb1, (H2,), jnp.float32, -bound1, bound1)
    w2b = jax.random.uniform(kw2, (H2, D_out), jnp.float32, -bound2b, bound2b)
    b2b = jax.random.uniform(kb2, (D_out,), jnp.float32, -bound2b, bound2b)
    y2_ref = reference(x, w1b, b1b, w2b, b2b)
    params2 = prepare_two_layer_net_params(w1b, b1b, w2b, b2b)
    y2 = two_layer_net_apply(params2, x, h_chunk=128)
    jax.block_until_ready(y2)
    assert y2.shape == (N, D_out)
    assert jnp.allclose(y2, y2_ref, atol=1e-5, rtol=1e-5)

    print("KERNEL_OK")
</pallas_src>

<mosaic_0001>
module attributes {stable_mosaic.version = 11 : i64} {
  func.func @_mlp_kernel(%arg0: i32, %arg1: memref<8x128xf32, #tpu.memory_space<vmem>>, %arg2: memref<128x128xf32, #tpu.memory_space<vmem>>, %arg3: memref<1x128xf32, #tpu.memory_space<vmem>>, %arg4: memref<128x128xf32, #tpu.memory_space<vmem>>, %arg5: memref<1x128xf32, #tpu.memory_space<vmem>>, %arg6: memref<8x128xf32, #tpu.memory_space<vmem>>) attributes {dimension_semantics = [#tpu.dimension_semantics<parallel>], iteration_bounds = array<i64: 1>, scalar_prefetch = 0 : i64, scratch_operands = 0 : i64, tpu.core_type = #tpu.core_type<tc>, window_params = [{transform_indices = @transform_0, window_bounds = array<i64: 8, 128>}, {pipeline_mode = #tpu.pipeline_mode<synchronous>, transform_indices = @transform_1, window_bounds = array<i64: 128, 128>}, {pipeline_mode = #tpu.pipeline_mode<synchronous>, transform_indices = @transform_2, window_bounds = array<i64: 1, 128>}, {pipeline_mode = #tpu.pipeline_mode<synchronous>, transform_indices = @transform_3, window_bounds = array<i64: 128, 128>}, {pipeline_mode = #tpu.pipeline_mode<synchronous>, transform_indices = @transform_4, window_bounds = array<i64: 1, 128>}, {transform_indices = @transform_5, window_bounds = array<i64: 8, 128>}]} {
    %c0 = arith.constant 0 : index
    %c0_0 = arith.constant 0 : index
    %0 = vector.load %arg1[%c0, %c0_0] : memref<8x128xf32, #tpu.memory_space<vmem>>, vector<8x128xf32>
    %c0_1 = arith.constant 0 : index
    %c0_2 = arith.constant 0 : index
    %1 = vector.load %arg2[%c0_1, %c0_2] : memref<128x128xf32, #tpu.memory_space<vmem>>, vector<128x128xf32>
    %cst = arith.constant dense<0.000000e+00> : vector<8x128xf32>
    %2 = tpu.matmul %0, %1, %cst {dimension_numbers = #tpu.dot_dimension_numbers<[1], [0], [0], [1], [0, 0, 1, 1], [], []>} : vector<8x128xf32>, vector<128x128xf32>, vector<8x128xf32> -> vector<8x128xf32>
    %c0_3 = arith.constant 0 : index
    %c0_4 = arith.constant 0 : index
    %3 = vector.load %arg3[%c0_3, %c0_4] : memref<1x128xf32, #tpu.memory_space<vmem>>, vector<1x128xf32>
    %4 = vector.broadcast %3 : vector<1x128xf32> to vector<8x128xf32>
    %5 = arith.addf %2, %4 : vector<8x128xf32>
    %cst_5 = arith.constant 0.000000e+00 : f32
    %6 = vector.broadcast %cst_5 : f32 to vector<8x128xf32>
    %7 = arith.maximumf %5, %6 : vector<8x128xf32>
    %c0_6 = arith.constant 0 : index
    %c0_7 = arith.constant 0 : index
    %8 = vector.load %arg4[%c0_6, %c0_7] : memref<128x128xf32, #tpu.memory_space<vmem>>, vector<128x128xf32>
    %cst_8 = arith.constant dense<0.000000e+00> : vector<8x128xf32>
    %9 = tpu.matmul %7, %8, %cst_8 {dimension_numbers = #tpu.dot_dimension_numbers<[1], [0], [0], [1], [0, 0, 1, 1], [], []>} : vector<8x128xf32>, vector<128x128xf32>, vector<8x128xf32> -> vector<8x128xf32>
    %c0_9 = arith.constant 0 : index
    %c0_10 = arith.constant 0 : index
    %10 = vector.load %arg5[%c0_9, %c0_10] : memref<1x128xf32, #tpu.memory_space<vmem>>, vector<1x128xf32>
    %11 = vector.broadcast %10 : vector<1x128xf32> to vector<8x128xf32>
    %12 = arith.addf %9, %11 : vector<8x128xf32>
    %c0_11 = arith.constant 0 : index
    %c0_12 = arith.constant 0 : index
    %13 = vector.load %arg6[%c0_11, %c0_12] : memref<8x128xf32, #tpu.memory_space<vmem>>, vector<8x128xf32>
    tpu.vector_store %arg6[%c0_11, %c0_12], %12 {strides = array<i32>} : memref<8x128xf32, #tpu.memory_space<vmem>>, vector<8x128xf32>,
    return
  }
  func.func @transform_0(%arg0: i32) -> (i32, i32) {
    %c0_i32 = arith.constant 0 : i32
    %c0_i32_0 = arith.constant 0 : i32
    return %arg0, %c0_i32 : i32, i32
  }
  func.func @transform_1(%arg0: i32) -> (i32, i32) {
    %c0_i32 = arith.constant 0 : i32
    %c0_i32_0 = arith.constant 0 : i32
    %c0_i32_1 = arith.constant 0 : i32
    return %c0_i32, %c0_i32_0 : i32, i32
  }
  func.func @transform_2(%arg0: i32) -> (i32, i32) {
    %c0_i32 = arith.constant 0 : i32
    %c0_i32_0 = arith.constant 0 : i32
    %c0_i32_1 = arith.constant 0 : i32
    return %c0_i32, %c0_i32_0 : i32, i32
  }
  func.func @transform_3(%arg0: i32) -> (i32, i32) {
    %c0_i32 = arith.constant 0 : i32
    %c0_i32_0 = arith.constant 0 : i32
    %c0_i32_1 = arith.constant 0 : i32
    return %c0_i32, %c0_i32_0 : i32, i32
  }
  func.func @transform_4(%arg0: i32) -> (i32, i32) {
    %c0_i32 = arith.constant 0 : i32
    %c0_i32_0 = arith.constant 0 : i32
    %c0_i32_1 = arith.constant 0 : i32
    return %c0_i32, %c0_i32_0 : i32, i32
  }
  func.func @transform_5(%arg0: i32) -> (i32, i32) {
    %c0_i32 = arith.constant 0 : i32
    %c0_i32_0 = arith.constant 0 : i32
    return %arg0, %c0_i32 : i32, i32
  }
}

module attributes {stable_mosaic.version = 11 : i64} {
  func.func @_mlp_kernel(%arg0: i32, %arg1: memref<8x128xf32, #tpu.memory_space<vmem>>, %arg2: memref<128x128xf32, #tpu.memory_space<vmem>>, %arg3: memref<1x128xf32, #tpu.memory_space<vmem>>, %arg4: memref<128x128xf32, #tpu.memory_space<vmem>>, %arg5: memref<1x128xf32, #tpu.memory_space<vmem>>, %arg6: memref<8x128xf32, #tpu.memory_space<vmem>>) attributes {dimension_semantics = [#tpu.dimension_semantics<parallel>], iteration_bounds = array<i64: 1>, scalar_prefetch = 0 : i64, scratch_operands = 0 : i64, tpu.core_type = #tpu.core_type<tc>, window_params = [{transform_indices = @transform_0, window_bounds = array<i64: 8, 128>}, {pipeline_mode = #tpu.pipeline_mode<synchronous>, transform_indices = @transform_1, window_bounds = array<i64: 128, 128>}, {pipeline_mode = #tpu.pipeline_mode<synchronous>, transform_indices = @transform_2, window_bounds = array<i64: 1, 128>}, {pipeline_mode = #tpu.pipeline_mode<synchronous>, transform_indices = @transform_3, window_bounds = array<i64: 128, 128>}, {pipeline_mode = #tpu.pipeline_mode<synchronous>, transform_indices = @transform_4, window_bounds = array<i64: 1, 128>}, {transform_indices = @transform_5, window_bounds = array<i64: 8, 128>}]} {
    %c0 = arith.constant 0 : index
    %c0_0 = arith.constant 0 : index
    %0 = vector.load %arg1[%c0, %c0_0] : memref<8x128xf32, #tpu.memory_space<vmem>>, vector<8x128xf32>
    %c0_1 = arith.constant 0 : index
    %c0_2 = arith.constant 0 : index
    %1 = vector.load %arg2[%c0_1, %c0_2] : memref<128x128xf32, #tpu.memory_space<vmem>>, vector<128x128xf32>
    %cst = arith.constant dense<0.000000e+00> : vector<8x128xf32>
    %2 = tpu.matmul %0, %1, %cst {dimension_numbers = #tpu.dot_dimension_numbers<[1], [0], [0], [1], [0, 0, 1, 1], [], []>} : vector<8x128xf32>, vector<128x128xf32>, vector<8x128xf32> -> vector<8x128xf32>
    %c0_3 = arith.constant 0 : index
    %c0_4 = arith.constant 0 : index
    %3 = vector.load %arg3[%c0_3, %c0_4] : memref<1x128xf32, #tpu.memory_space<vmem>>, vector<1x128xf32>
    %4 = vector.broadcast %3 : vector<1x128xf32> to vector<8x128xf32>
    %5 = arith.addf %2, %4 : vector<8x128xf32>
    %cst_5 = arith.constant 0.000000e+00 : f32
    %6 = vector.broadcast %cst_5 : f32 to vector<8x128xf32>
    %7 = arith.maximumf %5, %6 : vector<8x128xf32>
    %c0_6 = arith.constant 0 : index
    %c0_7 = arith.constant 0 : index
    %8 = vector.load %arg4[%c0_6, %c0_7] : memref<128x128xf32, #tpu.memory_space<vmem>>, vector<128x128xf32>
    %cst_8 = arith.constant dense<0.000000e+00> : vector<8x128xf32>
    %9 = tpu.matmul %7, %8, %cst_8 {dimension_numbers = #tpu.dot_dimension_numbers<[1], [0], [0], [1], [0, 0, 1, 1], [], []>} : vector<8x128xf32>, vector<128x128xf32>, vector<8x128xf32> -> vector<8x128xf32>
    %c0_9 = arith.constant 0 : index
    %c0_10 = arith.constant 0 : index
    %10 = vector.load %arg5[%c0_9, %c0_10] : memref<1x128xf32, #tpu.memory_space<vmem>>, vector<1x128xf32>
    %11 = vector.broadcast %10 : vector<1x128xf32> to vector<8x128xf32>
    %12 = arith.addf %9, %11 : vector<8x128xf32>
    %c0_11 = arith.constant 0 : index
    %c0_12 = arith.constant 0 : index
    %13 = vector.load %arg6[%c0_11, %c0_12] : memref<8x128xf32, #tpu.memory_space<vmem>>, vector<8x128xf32>
    tpu.vector_store %arg6[%c0_11, %c0_12], %12 {strides = array<i32>} : memref<8x128xf32, #tpu.memory_space<vmem>>, vector<8x128xf32>,
    return
  }
  func.func @transform_0(%arg0: i32) -> (i32, i32) {
    %c0_i32 = arith.constant 0 : i32
    %c0_i32_0 = arith.constant 0 : i32
    return %arg0, %c0_i32 : i32, i32
  }
  func.func @transform_1(%arg0: i32) -> (i32, i32) {
    %c0_i32 = arith.constant 0 : i32
    %c0_i32_0 = arith.constant 0 : i32
    %c0_i32_1 = arith.constant 0 : i32
    return %c0_i32, %c0_i32_0 : i32, i32
  }
  func.func @transform_2(%arg0: i32) -> (i32, i32) {
    %c0_i32 = arith.constant 0 : i32
    %c0_i32_0 = arith.constant 0 : i32
    %c0_i32_1 = arith.constant 0 : i32
    return %c0_i32, %c0_i32_0 : i32, i32
  }
  func.func @transform_3(%arg0: i32) -> (i32, i32) {
    %c0_i32 = arith.constant 0 : i32
    %c0_i32_0 = arith.constant 0 : i32
    %c0_i32_1 = arith.constant 0 : i32
    return %c0_i32, %c0_i32_0 : i32, i32
  }
  func.func @transform_4(%arg0: i32) -> (i32, i32) {
    %c0_i32 = arith.constant 0 : i32
    %c0_i32_0 = arith.constant 0 : i32
    %c0_i32_1 = arith.constant 0 : i32
    return %c0_i32, %c0_i32_0 : i32, i32
  }
  func.func @transform_5(%arg0: i32) -> (i32, i32) {
    %c0_i32 = arith.constant 0 : i32
    %c0_i32_0 = arith.constant 0 : i32
    return %arg0, %c0_i32 : i32, i32
  }
}

</mosaic_0001>

<llo_original>
// kernel: tpu_custom_call.1
$region0: #{tpu_custom_call.1}
  #allocation0 [shape = 'u32[]', space=smem, size = 0x4, offset = 0x4, fixed_abs, tag = 'smem constant byte address 0x4 - core index']
  #allocation1 [shape = 'u32[144,128]{1,0:T(1,128)}', space=vmem, size = 0x12000, scoped, tag = 'internal scratch']
  %s0 = inlined_call_operand.hbm [shape: f32[8,128], index: 0, kind: input, shape index: {}]
  %s1 = inlined_call_operand.hbm [shape: f32[128,128], index: 1, kind: input, shape index: {}]
  %s2 = inlined_call_operand.vmem [shape: f32[1,128], index: 2, kind: input, shape index: {}]
  %s3 = inlined_call_operand.hbm [shape: f32[128,128], index: 3, kind: input, shape index: {}]
  %s4 = inlined_call_operand.vmem [shape: f32[1,128], index: 4, kind: input, shape index: {}]
  %s5 = inlined_call_operand.hbm [shape: f32[8,128], index: 5, kind: output, shape index: {}]
  %s6 = sld [smem:[#allocation0]]
  $region42: #{tpu_custom_call.1} parent=0
    _
  %s8 = ssub.s32 1, %s6
  %s9 = scalar_select 0, %s8, %s6
  $region1: #{tpu_custom_call.1} parent=0
    #allocation2 [shape = 'u8[4096]{0}', space=vmem, size = 0x1000, scoped, tag = 'input window, operand 0, single buffered']
    #allocation3 [shape = 's32[1]{0}', space=sflag, size = 0x4, scoped, tag = 'scoped memory for tpu_custom_call.1']
    #allocation4 [shape = 's32[1]{0}', space=sflag, size = 0x4, scoped, tag = 'scoped memory for tpu_custom_call.1']
    #allocation5 [shape = 'u8[65536]{0}', space=vmem, size = 0x10000, scoped, tag = 'input window, operand 1, single buffered']
    #allocation6 [shape = 's32[1]{0}', space=sflag, size = 0x4, scoped, tag = 'scoped memory for tpu_custom_call.1']
    #allocation7 [shape = 'u8[65536]{0}', space=vmem, size = 0x10000, scoped, tag = 'input window, operand 3, single buffered']
    #allocation8 [shape = 'u8[4096]{0}', space=vmem, size = 0x1000, scoped, tag = 'output window, operand 0, single buffered']
    %10 = vsyncpa [#allocation3], 0
    %11 = vsyncpa [#allocation6], 0
    %12 = vsyncpa [#allocation4], 0
    // Predicated region
    $region2: #{tpu_custom_call.1} parent=1 // pred_check
      _
    $region3: #{tpu_custom_call.1} parent=1 // pred_check_branch
      %14 = sbr.rel (0) target = $region5
    $region4: #{tpu_custom_call.1} parent=1 // pred_region
      %s16 = ssub.s32 128, 128
      %17 = vsyncadd [#allocation3], %s16
      %s19 = sshll.u32 [#allocation2], 4
      %s20 = int_to_ptr.vmem [resolvable:$true] %s19
      %22 = dma.hbm_to_vmem [thread:$0]  %s0, 128, %s20, [#allocation3]
    $region5: #{tpu_custom_call.1} parent=1 // pred_fallthru
      _
    // Predicated region
    $region6: #{tpu_custom_call.1} parent=1 // pred_check
      _
    $region7: #{tpu_custom_call.1} parent=1 // pred_check_branch
      %24 = sbr.rel (0) target = $region9
    $region8: #{tpu_custom_call.1} parent=1 // pred_region
      %s26 = ssub.s32 2048, 2048
      %27 = vsyncadd [#allocation6], %s26
      %s28 = sshll.u32 [#allocation5], 4
      %s29 = int_to_ptr.vmem [resolvable:$true] %s28
      %34 = dma.hbm_to_vmem [thread:$0]  %s1, 2048, %s29, [#allocation6], 128, 128, 8
    $region9: #{tpu_custom_call.1} parent=1 // pred_fallthru
      _
    // Predicated region
    $region10: #{tpu_custom_call.1} parent=1 // pred_check
      _
    $region11: #{tpu_custom_call.1} parent=1 // pred_check_branch
      %36 = sbr.rel (0) target = $region13
    $region12: #{tpu_custom_call.1} parent=1 // pred_region
      _
    $region13: #{tpu_custom_call.1} parent=1 // pred_fallthru
      _
    // Predicated region
    $region14: #{tpu_custom_call.1} parent=1 // pred_check
      _
    $region15: #{tpu_custom_call.1} parent=1 // pred_check_branch
      %38 = sbr.rel (0) target = $region17
    $region16: #{tpu_custom_call.1} parent=1 // pred_region
      %s40 = ssub.s32 2048, 2048
      %41 = vsyncadd [#allocation6], %s40
      %s42 = sshll.u32 [#allocation7], 4
      %s43 = int_to_ptr.vmem [resolvable:$true] %s42
      %48 = dma.hbm_to_vmem [thread:$0]  %s3, 2048, %s43, [#allocation6], 128, 128, 8
    $region17: #{tpu_custom_call.1} parent=1 // pred_fallthru
      _
    // Predicated region
    $region18: #{tpu_custom_call.1} parent=1 // pred_check
      _
    $region19: #{tpu_custom_call.1} parent=1 // pred_check_branch
      %50 = sbr.rel (0) target = $region21
    $region20: #{tpu_custom_call.1} parent=1 // pred_region
      _
    $region21: #{tpu_custom_call.1} parent=1 // pred_fallthru
      _
    // Predicated region
    $region22: #{tpu_custom_call.1} parent=1 // pred_check
      _
    $region23: #{tpu_custom_call.1} parent=1 // pred_check_branch
      %52 = sbr.rel (0) target = $region25
    $region24: #{tpu_custom_call.1} parent=1 // pred_region
      %53 = dma.done [#allocation3], 128
    $region25: #{tpu_custom_call.1} parent=1 // pred_fallthru
      _
    // Predicated region
    $region26: #{tpu_custom_call.1} parent=1 // pred_check
      _
    $region27: #{tpu_custom_call.1} parent=1 // pred_check_branch
      %55 = sbr.rel (0) target = $region29
    $region28: #{tpu_custom_call.1} parent=1 // pred_region
      %56 = dma.done [#allocation6], 2048
    $region29: #{tpu_custom_call.1} parent=1 // pred_fallthru
      _
    // Predicated region
    $region30: #{tpu_custom_call.1} parent=1 // pred_check
      _
    $region31: #{tpu_custom_call.1} parent=1 // pred_check_branch
      %58 = sbr.rel (0) target = $region33
    $region32: #{tpu_custom_call.1} parent=1 // pred_region
      %59 = dma.done [#allocation6], 2048
    $region33: #{tpu_custom_call.1} parent=1 // pred_fallthru
      _
    %v60 = vld [vmem:[#allocation2] sm:$0xff]
    %v61 = vld [vmem:[#allocation5] sm:$0xff]
    %v62 = vld [vmem:[#allocation5 + $0x8] sm:$0xff]
    %v63 = vld [vmem:[#allocation5 + $0x10] sm:$0xff]
    %v64 = vld [vmem:[#allocation5 + $0x18] sm:$0xff]
    %v65 = vld [vmem:[#allocation5 + $0x20] sm:$0xff]
    %v66 = vld [vmem:[#allocation5 + $0x28] sm:$0xff]
    %v67 = vld [vmem:[#allocation5 + $0x30] sm:$0xff]
    %v68 = vld [vmem:[#allocation5 + $0x38] sm:$0xff]
    %v69 = vld [vmem:[#allocation5 + $0x40] sm:$0xff]
    %v70 = vld [vmem:[#allocation5 + $0x48] sm:$0xff]
    %v71 = vld [vmem:[#allocation5 + $0x50] sm:$0xff]
    %v72 = vld [vmem:[#allocation5 + $0x58] sm:$0xff]
    %v73 = vld [vmem:[#allocation5 + $0x60] sm:$0xff]
    %v74 = vld [vmem:[#allocation5 + $0x68] sm:$0xff]
    %v75 = vld [vmem:[#allocation5 + $0x70] sm:$0xff]
    %v76 = vld [vmem:[#allocation5 + $0x78] sm:$0xff]
    %v77 = vld [vmem:[%s2] sm:$0x1]
    %v79 = vlaneseq
    %v80 = vshrl.u32 %v79, 7
    %v81 = vsub.s32 0, %v80
    %v82 = vrot.slane %v77, %v81
    %84 = vmatprep.subr.mxu0 0.0
    %85 = vmatpush1.msra.mxu0 %v76
    %86 = vmatprep.subr.mxu0 0.0
    %87 = vmatpush1.msra.mxu0 %v75
    %88 = vmatprep.subr.mxu0 0.0
    %89 = vmatpush1.msra.mxu0 %v74
    %90 = vmatprep.subr.mxu0 0.0
    %91 = vmatpush1.msra.mxu0 %v73
    %92 = vmatprep.subr.mxu0 0.0
    %93 = vmatpush1.msra.mxu0 %v72
    %94 = vmatprep.subr.mxu0 0.0
    %95 = vmatpush1.msra.mxu0 %v71
    %96 = vmatprep.subr.mxu0 0.0
    %97 = vmatpush1.msra.mxu0 %v70
    %98 = vmatprep.subr.mxu0 0.0
    %99 = vmatpush1.msra.mxu0 %v69
    %100 = vmatprep.subr.mxu0 0.0
    %101 = vmatpush1.msra.mxu0 %v68
    %102 = vmatprep.subr.mxu0 0.0
    %103 = vmatpush1.msra.mxu0 %v67
    %104 = vmatprep.subr.mxu0 0.0
    %105 = vmatpush1.msra.mxu0 %v66
    %106 = vmatprep.subr.mxu0 0.0
    %107 = vmatpush1.msra.mxu0 %v65
    %108 = vmatprep.subr.mxu0 0.0
    %109 = vmatpush1.msra.mxu0 %v64
    %110 = vmatprep.subr.mxu0 0.0
    %111 = vmatpush1.msra.mxu0 %v63
    %112 = vmatprep.subr.mxu0 0.0
    %113 = vmatpush1.msra.mxu0 %v62
    %114 = vmatprep.subr.mxu0 0.0
    %115 = vmatpush1.msra.mxu0 %v61
    %116 = vmatprep.subr.mxu0 0.0
    %117 = vmatpush2.msra.mxu0 0.0
    %118 = vmatprep.subr.mxu0 0.0
    %119 = vmatpush2.msra.mxu0 0.0
    %120 = vmatprep.subr.mxu0 0.0
    %121 = vmatpush2.msra.mxu0 0.0
    %122 = vmatprep.subr.mxu0 0.0
    %123 = vmatpush2.msra.mxu0 0.0
    %124 = vmatprep.subr.mxu0 0.0
    %125 = vmatpush2.msra.mxu0 0.0
    %126 = vmatprep.subr.mxu0 0.0
    %127 = vmatpush2.msra.mxu0 0.0
    %128 = vmatprep.subr.mxu0 0.0
    %129 = vmatpush2.msra.mxu0 0.0
    %130 = vmatprep.subr.mxu0 0.0
    %131 = vmatpush2.msra.mxu0 0.0
    %132 = vmatprep.subr.mxu0 0.0
    %133 = vmatpush2.msra.mxu0 0.0
    %134 = vmatprep.subr.mxu0 0.0
    %135 = vmatpush2.msra.mxu0 0.0
    %136 = vmatprep.subr.mxu0 0.0
    %137 = vmatpush2.msra.mxu0 0.0
    %138 = vmatprep.subr.mxu0 0.0
    %139 = vmatpush2.msra.mxu0 0.0
    %140 = vmatprep.subr.mxu0 0.0
    %141 = vmatpush2.msra.mxu0 0.0
    %142 = vmatprep.subr.mxu0 0.0
    %143 = vmatpush2.msra.mxu0 0.0
    %144 = vmatprep.subr.mxu0 0.0
    %145 = vmatpush2.msra.mxu0 0.0
    %146 = vmatprep.subr.mxu0 0.0
    %147 = vmatpush2.msra.mxu0 0.0
    %148 = vmatprep.mubr.f32.mxu0 0.0
    %149 = vmatmul.mubr.f32.gmra.mxu0 %v60
    %v150 = vpop.f32.mrf.mxu0
    %v151 = vadd.f32 %v82, %v150
    %v152 = vpop.f32.mrf.mxu0
    %153 = vdwg.mxu0
    %v154 = vmax.f32 %v151, 0.0
    %v155 = vld [vmem:[#allocation7] sm:$0xff]
    %v156 = vld [vmem:[#allocation7 + $0x8] sm:$0xff]
    %v157 = vld [vmem:[#allocation7 + $0x10] sm:$0xff]
    %v158 = vld [vmem:[#allocation7 + $0x18] sm:$0xff]
    %v159 = vld [vmem:[#allocation7 + $0x20] sm:$0xff]
    %v160 = vld [vmem:[#allocation7 + $0x28] sm:$0xff]
    %v161 = vld [vmem:[#allocation7 + $0x30] sm:$0xff]
    %v162 = vld [vmem:[#allocation7 + $0x38] sm:$0xff]
    %v163 = vld [vmem:[#allocation7 + $0x40] sm:$0xff]
    %v164 = vld [vmem:[#allocation7 + $0x48] sm:$0xff]
    %v165 = vld [vmem:[#allocation7 + $0x50] sm:$0xff]
    %v166 = vld [vmem:[#allocation7 + $0x58] sm:$0xff]
    %v167 = vld [vmem:[#allocation7 + $0x60] sm:$0xff]
    %v168 = vld [vmem:[#allocation7 + $0x68] sm:$0xff]
    %v169 = vld [vmem:[#allocation7 + $0x70] sm:$0xff]
    %v170 = vld [vmem:[#allocation7 + $0x78] sm:$0xff]
    %v171 = vld [vmem:[%s4] sm:$0x1]
    %v173 = vlaneseq
    %v174 = vshrl.u32 %v173, 7
    %v175 = vsub.s32 0, %v174
    %v176 = vrot.slane %v171, %v175
    %178 = vmatprep.subr.mxu0 0.0
    %179 = vmatpush1.msra.mxu0 %v170
    %180 = vmatprep.subr.mxu0 0.0
    %181 = vmatpush1.msra.mxu0 %v169
    %182 = vmatprep.subr.mxu0 0.0
    %183 = vmatpush1.msra.mxu0 %v168
    %184 = vmatprep.subr.mxu0 0.0
    %185 = vmatpush1.msra.mxu0 %v167
    %186 = vmatprep.subr.mxu0 0.0
    %187 = vmatpush1.msra.mxu0 %v166
    %188 = vmatprep.subr.mxu0 0.0
    %189 = vmatpush1.msra.mxu0 %v165
    %190 = vmatprep.subr.mxu0 0.0
    %191 = vmatpush1.msra.mxu0 %v164
    %192 = vmatprep.subr.mxu0 0.0
    %193 = vmatpush1.msra.mxu0 %v163
    %194 = vmatprep.subr.mxu0 0.0
    %195 = vmatpush1.msra.mxu0 %v162
    %196 = vmatprep.subr.mxu0 0.0
    %197 = vmatpush1.msra.mxu0 %v161
    %198 = vmatprep.subr.mxu0 0.0
    %199 = vmatpush1.msra.mxu0 %v160
    %200 = vmatprep.subr.mxu0 0.0
    %201 = vmatpush1.msra.mxu0 %v159
    %202 = vmatprep.subr.mxu0 0.0
    %203 = vmatpush1.msra.mxu0 %v158
    %204 = vmatprep.subr.mxu0 0.0
    %205 = vmatpush1.msra.mxu0 %v157
    %206 = vmatprep.subr.mxu0 0.0
    %207 = vmatpush1.msra.mxu0 %v156
    %208 = vmatprep.subr.mxu0 0.0
    %209 = vmatpush1.msra.mxu0 %v155
    %210 = vmatprep.subr.mxu0 0.0
    %211 = vmatpush2.msra.mxu0 0.0
    %212 = vmatprep.subr.mxu0 0.0
    %213 = vmatpush2.msra.mxu0 0.0
    %214 = vmatprep.subr.mxu0 0.0
    %215 = vmatpush2.msra.mxu0 0.0
    %216 = vmatprep.subr.mxu0 0.0
    %217 = vmatpush2.msra.mxu0 0.0
    %218 = vmatprep.subr.mxu0 0.0
    %219 = vmatpush2.msra.mxu0 0.0
    %220 = vmatprep.subr.mxu0 0.0
    %221 = vmatpush2.msra.mxu0 0.0
    %222 = vmatprep.subr.mxu0 0.0
    %223 = vmatpush2.msra.mxu0 0.0
    %224 = vmatprep.subr.mxu0 0.0
    %225 = vmatpush2.msra.mxu0 0.0
    %226 = vmatprep.subr.mxu0 0.0
    %227 = vmatpush2.msra.mxu0 0.0
    %228 = vmatprep.subr.mxu0 0.0
    %229 = vmatpush2.msra.mxu0 0.0
    %230 = vmatprep.subr.mxu0 0.0
    %231 = vmatpush2.msra.mxu0 0.0
    %232 = vmatprep.subr.mxu0 0.0
    %233 = vmatpush2.msra.mxu0 0.0
    %234 = vmatprep.subr.mxu0 0.0
    %235 = vmatpush2.msra.mxu0 0.0
    %236 = vmatprep.subr.mxu0 0.0
    %237 = vmatpush2.msra.mxu0 0.0
    %238 = vmatprep.subr.mxu0 0.0
    %239 = vmatpush2.msra.mxu0 0.0
    %240 = vmatprep.subr.mxu0 0.0
    %241 = vmatpush2.msra.mxu0 0.0
    %242 = vmatprep.mubr.f32.mxu0 0.0
    %243 = vmatmul.mubr.f32.gmra.mxu0 %v154
    %v244 = vpop.f32.mrf.mxu0
    %v245 = vadd.f32 %v176, %v244
    %v246 = vpop.f32.mrf.mxu0
    %247 = vdwg.mxu0
    %248 = vst [vmem:[#allocation8] sm:$0xff] %v245
    // Predicated region
    $region34: #{tpu_custom_call.1} parent=1 // pred_check
      _
    $region35: #{tpu_custom_call.1} parent=1 // pred_check_branch
      %250 = sbr.rel (0) target = $region37
    $region36: #{tpu_custom_call.1} parent=1 // pred_region
      %s252 = ssub.s32 128, 128
      %253 = vsyncadd [#allocation4], %s252
      %s255 = sshll.u32 [#allocation8], 4
      %s256 = int_to_ptr.vmem [resolvable:$true] %s255
      %258 = dma.vmem_to_hbm [thread:$0]  %s256, 128, %s5, [#allocation4]
    $region37: #{tpu_custom_call.1} parent=1 // pred_fallthru
      _
    // Predicated region
    $region38: #{tpu_custom_call.1} parent=1 // pred_check
      _
    $region39: #{tpu_custom_call.1} parent=1 // pred_check_branch
      %260 = sbr.rel (0) target = $region41
    $region40: #{tpu_custom_call.1} parent=1 // pred_region
      %261 = dma.done [#allocation4], 128
    $region41: #{tpu_custom_call.1} parent=1 // pred_fallthru
      _
    %262 = vsyncpa [#allocation3], 1
    %263 = vsyncpa [#allocation6], 1
    %264 = vsyncpa [#allocation4], 1

// kernel: tpu_custom_call.1
$region0: #{tpu_custom_call.1}
  #allocation0 [shape = 'u32[]', space=smem, size = 0x4, offset = 0x4, fixed_abs, tag = 'smem constant byte address 0x4 - core index']
  #allocation1 [shape = 'u32[144,128]{1,0:T(1,128)}', space=vmem, size = 0x12000, scoped, tag = 'internal scratch']
  %s0 = inlined_call_operand.hbm [shape: f32[8,128], index: 0, kind: input, shape index: {}]
  %s1 = inlined_call_operand.hbm [shape: f32[128,128], index: 1, kind: input, shape index: {}]
  %s2 = inlined_call_operand.vmem [shape: f32[1,128], index: 2, kind: input, shape index: {}]
  %s3 = inlined_call_operand.hbm [shape: f32[128,128], index: 3, kind: input, shape index: {}]
  %s4 = inlined_call_operand.vmem [shape: f32[1,128], index: 4, kind: input, shape index: {}]
  %s5 = inlined_call_operand.hbm [shape: f32[8,128], index: 5, kind: output, shape index: {}]
  %s6 = sld [smem:[#allocation0]]
  $region42: #{tpu_custom_call.1} parent=0
    _
  %s8 = ssub.s32 1, %s6
  %s9 = scalar_select 0, %s8, %s6
  $region1: #{tpu_custom_call.1} parent=0
    #allocation2 [shape = 'u8[4096]{0}', space=vmem, size = 0x1000, scoped, tag = 'input window, operand 0, single buffered']
    #allocation3 [shape = 's32[1]{0}', space=sflag, size = 0x4, scoped, tag = 'scoped memory for tpu_custom_call.1']
    #allocation4 [shape = 's32[1]{0}', space=sflag, size = 0x4, scoped, tag = 'scoped memory for tpu_custom_call.1']
    #allocation5 [shape = 'u8[65536]{0}', space=vmem, size = 0x10000, scoped, tag = 'input window, operand 1, single buffered']
    #allocation6 [shape = 's32[1]{0}', space=sflag, size = 0x4, scoped, tag = 'scoped memory for tpu_custom_call.1']
    #allocation7 [shape = 'u8[65536]{0}', space=vmem, size = 0x10000, scoped, tag = 'input window, operand 3, single buffered']
    #allocation8 [shape = 'u8[4096]{0}', space=vmem, size = 0x1000, scoped, tag = 'output window, operand 0, single buffered']
    %10 = vsyncpa [#allocation3], 0
    %11 = vsyncpa [#allocation6], 0
    %12 = vsyncpa [#allocation4], 0
    // Predicated region
    $region2: #{tpu_custom_call.1} parent=1 // pred_check
      _
    $region3: #{tpu_custom_call.1} parent=1 // pred_check_branch
      %14 = sbr.rel (0) target = $region5
    $region4: #{tpu_custom_call.1} parent=1 // pred_region
      %s16 = ssub.s32 128, 128
      %17 = vsyncadd [#allocation3], %s16
      %s19 = sshll.u32 [#allocation2], 4
      %s20 = int_to_ptr.vmem [resolvable:$true] %s19
      %22 = dma.hbm_to_vmem [thread:$0]  %s0, 128, %s20, [#allocation3]
    $region5: #{tpu_custom_call.1} parent=1 // pred_fallthru
      _
    // Predicated region
    $region6: #{tpu_custom_call.1} parent=1 // pred_check
      _
    $region7: #{tpu_custom_call.1} parent=1 // pred_check_branch
      %24 = sbr.rel (0) target = $region9
    $region8: #{tpu_custom_call.1} parent=1 // pred_region
      %s26 = ssub.s32 2048, 2048
      %27 = vsyncadd [#allocation6], %s26
      %s28 = sshll.u32 [#allocation5], 4
      %s29 = int_to_ptr.vmem [resolvable:$true] %s28
      %34 = dma.hbm_to_vmem [thread:$0]  %s1, 2048, %s29, [#allocation6], 128, 128, 8
    $region9: #{tpu_custom_call.1} parent=1 // pred_fallthru
      _
    // Predicated region
    $region10: #{tpu_custom_call.1} parent=1 // pred_check
      _
    $region11: #{tpu_custom_call.1} parent=1 // pred_check_branch
      %36 = sbr.rel (0) target = $region13
    $region12: #{tpu_custom_call.1} parent=1 // pred_region
      _
    $region13: #{tpu_custom_call.1} parent=1 // pred_fallthru
      _
    // Predicated region
    $region14: #{tpu_custom_call.1} parent=1 // pred_check
      _
    $region15: #{tpu_custom_call.1} parent=1 // pred_check_branch
      %38 = sbr.rel (0) target = $region17
    $region16: #{tpu_custom_call.1} parent=1 // pred_region
      %s40 = ssub.s32 2048, 2048
      %41 = vsyncadd [#allocation6], %s40
      %s42 = sshll.u32 [#allocation7], 4
      %s43 = int_to_ptr.vmem [resolvable:$true] %s42
      %48 = dma.hbm_to_vmem [thread:$0]  %s3, 2048, %s43, [#allocation6], 128, 128, 8
    $region17: #{tpu_custom_call.1} parent=1 // pred_fallthru
      _
    // Predicated region
    $region18: #{tpu_custom_call.1} parent=1 // pred_check
      _
    $region19: #{tpu_custom_call.1} parent=1 // pred_check_branch
      %50 = sbr.rel (0) target = $region21
    $region20: #{tpu_custom_call.1} parent=1 // pred_region
      _
    $region21: #{tpu_custom_call.1} parent=1 // pred_fallthru
      _
    // Predicated region
    $region22: #{tpu_custom_call.1} parent=1 // pred_check
      _
    $region23: #{tpu_custom_call.1} parent=1 // pred_check_branch
      %52 = sbr.rel (0) target = $region25
    $region24: #{tpu_custom_call.1} parent=1 // pred_region
      %53 = dma.done [#allocation3], 128
    $region25: #{tpu_custom_call.1} parent=1 // pred_fallthru
      _
    // Predicated region
    $region26: #{tpu_custom_call.1} parent=1 // pred_check
      _
    $region27: #{tpu_custom_call.1} parent=1 // pred_check_branch
      %55 = sbr.rel (0) target = $region29
    $region28: #{tpu_custom_call.1} parent=1 // pred_region
      %56 = dma.done [#allocation6], 2048
    $region29: #{tpu_custom_call.1} parent=1 // pred_fallthru
      _
    // Predicated region
    $region30: #{tpu_custom_call.1} parent=1 // pred_check
      _
    $region31: #{tpu_custom_call.1} parent=1 // pred_check_branch
      %58 = sbr.rel (0) target = $region33
    $region32: #{tpu_custom_call.1} parent=1 // pred_region
      %59 = dma.done [#allocation6], 2048
    $region33: #{tpu_custom_call.1} parent=1 // pred_fallthru
      _
    %v60 = vld [vmem:[#allocation2] sm:$0xff]
    %v61 = vld [vmem:[#allocation5] sm:$0xff]
    %v62 = vld [vmem:[#allocation5 + $0x8] sm:$0xff]
    %v63 = vld [vmem:[#allocation5 + $0x10] sm:$0xff]
    %v64 = vld [vmem:[#allocation5 + $0x18] sm:$0xff]
    %v65 = vld [vmem:[#allocation5 + $0x20] sm:$0xff]
    %v66 = vld [vmem:[#allocation5 + $0x28] sm:$0xff]
    %v67 = vld [vmem:[#allocation5 + $0x30] sm:$0xff]
    %v68 = vld [vmem:[#allocation5 + $0x38] sm:$0xff]
    %v69 = vld [vmem:[#allocation5 + $0x40] sm:$0xff]
    %v70 = vld [vmem:[#allocation5 + $0x48] sm:$0xff]
    %v71 = vld [vmem:[#allocation5 + $0x50] sm:$0xff]
    %v72 = vld [vmem:[#allocation5 + $0x58] sm:$0xff]
    %v73 = vld [vmem:[#allocation5 + $0x60] sm:$0xff]
    %v74 = vld [vmem:[#allocation5 + $0x68] sm:$0xff]
    %v75 = vld [vmem:[#allocation5 + $0x70] sm:$0xff]
    %v76 = vld [vmem:[#allocation5 + $0x78] sm:$0xff]
    %v77 = vld [vmem:[%s2] sm:$0x1]
    %v79 = vlaneseq
    %v80 = vshrl.u32 %v79, 7
    %v81 = vsub.s32 0, %v80
    %v82 = vrot.slane %v77, %v81
    %84 = vmatprep.subr.mxu0 0.0
    %85 = vmatpush1.msra.mxu0 %v76
    %86 = vmatprep.subr.mxu0 0.0
    %87 = vmatpush1.msra.mxu0 %v75
    %88 = vmatprep.subr.mxu0 0.0
    %89 = vmatpush1.msra.mxu0 %v74
    %90 = vmatprep.subr.mxu0 0.0
    %91 = vmatpush1.msra.mxu0 %v73
    %92 = vmatprep.subr.mxu0 0.0
    %93 = vmatpush1.msra.mxu0 %v72
    %94 = vmatprep.subr.mxu0 0.0
    %95 = vmatpush1.msra.mxu0 %v71
    %96 = vmatprep.subr.mxu0 0.0
    %97 = vmatpush1.msra.mxu0 %v70
    %98 = vmatprep.subr.mxu0 0.0
    %99 = vmatpush1.msra.mxu0 %v69
    %100 = vmatprep.subr.mxu0 0.0
    %101 = vmatpush1.msra.mxu0 %v68
    %102 = vmatprep.subr.mxu0 0.0
    %103 = vmatpush1.msra.mxu0 %v67
    %104 = vmatprep.subr.mxu0 0.0
    %105 = vmatpush1.msra.mxu0 %v66
    %106 = vmatprep.subr.mxu0 0.0
    %107 = vmatpush1.msra.mxu0 %v65
    %108 = vmatprep.subr.mxu0 0.0
    %109 = vmatpush1.msra.mxu0 %v64
    %110 = vmatprep.subr.mxu0 0.0
    %111 = vmatpush1.msra.mxu0 %v63
    %112 = vmatprep.subr.mxu0 0.0
    %113 = vmatpush1.msra.mxu0 %v62
    %114 = vmatprep.subr.mxu0 0.0
    %115 = vmatpush1.msra.mxu0 %v61
    %116 = vmatprep.subr.mxu0 0.0
    %117 = vmatpush2.msra.mxu0 0.0
    %118 = vmatprep.subr.mxu0 0.0
    %119 = vmatpush2.msra.mxu0 0.0
    %120 = vmatprep.subr.mxu0 0.0
    %121 = vmatpush2.msra.mxu0 0.0
    %122 = vmatprep.subr.mxu0 0.0
    %123 = vmatpush2.msra.mxu0 0.0
    %124 = vmatprep.subr.mxu0 0.0
    %125 = vmatpush2.msra.mxu0 0.0
    %126 = vmatprep.subr.mxu0 0.0
    %127 = vmatpush2.msra.mxu0 0.0
    %128 = vmatprep.subr.mxu0 0.0
    %129 = vmatpush2.msra.mxu0 0.0
    %130 = vmatprep.subr.mxu0 0.0
    %131 = vmatpush2.msra.mxu0 0.0
    %132 = vmatprep.subr.mxu0 0.0
    %133 = vmatpush2.msra.mxu0 0.0
    %134 = vmatprep.subr.mxu0 0.0
    %135 = vmatpush2.msra.mxu0 0.0
    %136 = vmatprep.subr.mxu0 0.0
    %137 = vmatpush2.msra.mxu0 0.0
    %138 = vmatprep.subr.mxu0 0.0
    %139 = vmatpush2.msra.mxu0 0.0
    %140 = vmatprep.subr.mxu0 0.0
    %141 = vmatpush2.msra.mxu0 0.0
    %142 = vmatprep.subr.mxu0 0.0
    %143 = vmatpush2.msra.mxu0 0.0
    %144 = vmatprep.subr.mxu0 0.0
    %145 = vmatpush2.msra.mxu0 0.0
    %146 = vmatprep.subr.mxu0 0.0
    %147 = vmatpush2.msra.mxu0 0.0
    %148 = vmatprep.mubr.f32.mxu0 0.0
    %149 = vmatmul.mubr.f32.gmra.mxu0 %v60
    %v150 = vpop.f32.mrf.mxu0
    %v151 = vadd.f32 %v82, %v150
    %v152 = vpop.f32.mrf.mxu0
    %153 = vdwg.mxu0
    %v154 = vmax.f32 %v151, 0.0
    %v155 = vld [vmem:[#allocation7] sm:$0xff]
    %v156 = vld [vmem:[#allocation7 + $0x8] sm:$0xff]
    %v157 = vld [vmem:[#allocation7 + $0x10] sm:$0xff]
    %v158 = vld [vmem:[#allocation7 + $0x18] sm:$0xff]
    %v159 = vld [vmem:[#allocation7 + $0x20] sm:$0xff]
    %v160 = vld [vmem:[#allocation7 + $0x28] sm:$0xff]
    %v161 = vld [vmem:[#allocation7 + $0x30] sm:$0xff]
    %v162 = vld [vmem:[#allocation7 + $0x38] sm:$0xff]
    %v163 = vld [vmem:[#allocation7 + $0x40] sm:$0xff]
    %v164 = vld [vmem:[#allocation7 + $0x48] sm:$0xff]
    %v165 = vld [vmem:[#allocation7 + $0x50] sm:$0xff]
    %v166 = vld [vmem:[#allocation7 + $0x58] sm:$0xff]
    %v167 = vld [vmem:[#allocation7 + $0x60] sm:$0xff]
    %v168 = vld [vmem:[#allocation7 + $0x68] sm:$0xff]
    %v169 = vld [vmem:[#allocation7 + $0x70] sm:$0xff]
    %v170 = vld [vmem:[#allocation7 + $0x78] sm:$0xff]
    %v171 = vld [vmem:[%s4] sm:$0x1]
    %v173 = vlaneseq
    %v174 = vshrl.u32 %v173, 7
    %v175 = vsub.s32 0, %v174
    %v176 = vrot.slane %v171, %v175
    %178 = vmatprep.subr.mxu0 0.0
    %179 = vmatpush1.msra.mxu0 %v170
    %180 = vmatprep.subr.mxu0 0.0
    %181 = vmatpush1.msra.mxu0 %v169
    %182 = vmatprep.subr.mxu0 0.0
    %183 = vmatpush1.msra.mxu0 %v168
    %184 = vmatprep.subr.mxu0 0.0
    %185 = vmatpush1.msra.mxu0 %v167
    %186 = vmatprep.subr.mxu0 0.0
    %187 = vmatpush1.msra.mxu0 %v166
    %188 = vmatprep.subr.mxu0 0.0
    %189 = vmatpush1.msra.mxu0 %v165
    %190 = vmatprep.subr.mxu0 0.0
    %191 = vmatpush1.msra.mxu0 %v164
    %192 = vmatprep.subr.mxu0 0.0
    %193 = vmatpush1.msra.mxu0 %v163
    %194 = vmatprep.subr.mxu0 0.0
    %195 = vmatpush1.msra.mxu0 %v162
    %196 = vmatprep.subr.mxu0 0.0
    %197 = vmatpush1.msra.mxu0 %v161
    %198 = vmatprep.subr.mxu0 0.0
    %199 = vmatpush1.msra.mxu0 %v160
    %200 = vmatprep.subr.mxu0 0.0
    %201 = vmatpush1.msra.mxu0 %v159
    %202 = vmatprep.subr.mxu0 0.0
    %203 = vmatpush1.msra.mxu0 %v158
    %204 = vmatprep.subr.mxu0 0.0
    %205 = vmatpush1.msra.mxu0 %v157
    %206 = vmatprep.subr.mxu0 0.0
    %207 = vmatpush1.msra.mxu0 %v156
    %208 = vmatprep.subr.mxu0 0.0
    %209 = vmatpush1.msra.mxu0 %v155
    %210 = vmatprep.subr.mxu0 0.0
    %211 = vmatpush2.msra.mxu0 0.0
    %212 = vmatprep.subr.mxu0 0.0
    %213 = vmatpush2.msra.mxu0 0.0
    %214 = vmatprep.subr.mxu0 0.0
    %215 = vmatpush2.msra.mxu0 0.0
    %216 = vmatprep.subr.mxu0 0.0
    %217 = vmatpush2.msra.mxu0 0.0
    %218 = vmatprep.subr.mxu0 0.0
    %219 = vmatpush2.msra.mxu0 0.0
    %220 = vmatprep.subr.mxu0 0.0
    %221 = vmatpush2.msra.mxu0 0.0
    %222 = vmatprep.subr.mxu0 0.0
    %223 = vmatpush2.msra.mxu0 0.0
    %224 = vmatprep.subr.mxu0 0.0
    %225 = vmatpush2.msra.mxu0 0.0
    %226 = vmatprep.subr.mxu0 0.0
    %227 = vmatpush2.msra.mxu0 0.0
    %228 = vmatprep.subr.mxu0 0.0
    %229 = vmatpush2.msra.mxu0 0.0
    %230 = vmatprep.subr.mxu0 0.0
    %231 = vmatpush2.msra.mxu0 0.0
    %232 = vmatprep.subr.mxu0 0.0
    %233 = vmatpush2.msra.mxu0 0.0
    %234 = vmatprep.subr.mxu0 0.0
    %235 = vmatpush2.msra.mxu0 0.0
    %236 = vmatprep.subr.mxu0 0.0
    %237 = vmatpush2.msra.mxu0 0.0
    %238 = vmatprep.subr.mxu0 0.0
    %239 = vmatpush2.msra.mxu0 0.0
    %240 = vmatprep.subr.mxu0 0.0
    %241 = vmatpush2.msra.mxu0 0.0
    %242 = vmatprep.mubr.f32.mxu0 0.0
    %243 = vmatmul.mubr.f32.gmra.mxu0 %v154
    %v244 = vpop.f32.mrf.mxu0
    %v245 = vadd.f32 %v176, %v244
    %v246 = vpop.f32.mrf.mxu0
    %247 = vdwg.mxu0
    %248 = vst [vmem:[#allocation8] sm:$0xff] %v245
    // Predicated region
    $region34: #{tpu_custom_call.1} parent=1 // pred_check
      _
    $region35: #{tpu_custom_call.1} parent=1 // pred_check_branch
      %250 = sbr.rel (0) target = $region37
    $region36: #{tpu_custom_call.1} parent=1 // pred_region
      %s252 = ssub.s32 128, 128
      %253 = vsyncadd [#allocation4], %s252
      %s255 = sshll.u32 [#allocation8], 4
      %s256 = int_to_ptr.vmem [resolvable:$true] %s255
      %258 = dma.vmem_to_hbm [thread:$0]  %s256, 128, %s5, [#allocation4]
    $region37: #{tpu_custom_call.1} parent=1 // pred_fallthru
      _
    // Predicated region
    $region38: #{tpu_custom_call.1} parent=1 // pred_check
      _
    $region39: #{tpu_custom_call.1} parent=1 // pred_check_branch
      %260 = sbr.rel (0) target = $region41
    $region40: #{tpu_custom_call.1} parent=1 // pred_region
      %261 = dma.done [#allocation4], 128
    $region41: #{tpu_custom_call.1} parent=1 // pred_fallthru
      _
    %262 = vsyncpa [#allocation3], 1
    %263 = vsyncpa [#allocation6], 1
    %264 = vsyncpa [#allocation4], 1

</llo_original>
